<compile_context>
chip_gen: v5e
topology: v5e:2x2
jax: 0.10.0
libtpu: 0.0.40
codegen_flags: <defaults>
</compile_context>

<pallas_src>
import math
from functools import partial

import jax
import jax.numpy as jnp
from jax.experimental import pallas as pl
from jax.experimental.pallas import tpu as pltpu

# ---- static model config (small synthetic shapes) ----
BATCH = 2
SEQ = 8
DIM = 32
NUM_HEADS = 4
HEAD_DIM = DIM // NUM_HEADS


def _mta_kernel(tok_ref, win_ref, bin_ref, wout_ref, bout_ref, o_ref, *, num_heads):
    """Single invocation over the whole problem.

    tok_ref  : (B, S, D)   VMEM  input tokens
    win_ref  : (D, 3D)     VMEM  fused in-proj weight (Q columns pre-scaled by 1/sqrt(hd))
    bin_ref  : (1, 3D)     VMEM  fused in-proj bias   (Q part pre-scaled)
    wout_ref : (D, D)      VMEM  out-proj weight (already transposed for x @ W)
    bout_ref : (1, D)      VMEM  out-proj bias
    o_ref    : (B, D)      VMEM  output (mean over seq of attended tokens)
    """
    B, S, D = tok_ref.shape
    H = num_heads
    hd = D // H

    # ---- fused QKV projection: one MXU matmul, (B*S, D) @ (D, 3D) ----
    x2d = tok_ref[...].reshape(B * S, D)                       # leading-dim merge only
    qkv = jnp.dot(x2d, win_ref[...],
                  preferred_element_type=jnp.float32) + bin_ref[...]   # (B*S, 3D)

    # Lane-dense Q/K/V slabs; leading-dim split back to (B, S, D).
    q = qkv[:, 0 * D:1 * D].reshape(B, S, D)
    k = qkv[:, 1 * D:2 * D].reshape(B, S, D)
    v = qkv[:, 2 * D:3 * D].reshape(B, S, D)

    # Per-head attention.  The score / P@V contractions are inherently per-head;
    # H=4 is statically unrolled so everything stays a plain 2D/3D dot_general.
    # The seq-mean is folded through P@V and the out-projection (both linear in q).
    acc = jnp.zeros((B, D), jnp.float32)
    for h in range(H):
        lo = h * hd
        qh = q[:, :, lo:lo + hd]                                # (B, S, hd)
        kh = k[:, :, lo:lo + hd]                                # (B, S, hd)
        vh = v[:, :, lo:lo + hd]                                # (B, S, hd)

        # scores (scale already folded into Q); K contracted in native layout.
        s = jnp.einsum("bqd,bkd->bqk", qh, kh,
                       preferred_element_type=jnp.float32)      # (B, S, S)
        s = s - jnp.max(s, axis=-1, keepdims=True)
        e = jnp.exp(s)
        p = e / jnp.sum(e, axis=-1, keepdims=True)               # exact softmax

        # mean over the query axis, then O(1)-in-S tail:
        p_mean = jnp.mean(p, axis=1, keepdims=True)              # (B, 1, S)
        oh = jnp.einsum("bqk,bkd->bqd", p_mean, vh,
                        preferred_element_type=jnp.float32)      # (B, 1, hd)
        # per-head out-projection row-slice; summing over heads == concat @ W_out
        acc = acc + jnp.dot(oh.reshape(B, hd), wout_ref[lo:lo + hd, :],
                            preferred_element_type=jnp.float32)  # (B, D)

    o_ref[...] = acc + bout_ref[...]


def multi_token_attention(tokens, w_in_t, b_in, w_out_t, b_out, *, num_heads=NUM_HEADS):
    """tokens: (B, S, D) f32 -> (B, D) f32.

    w_in_t : (D, 3D)  in_proj weight, pre-transposed so the kernel computes x @ W
    b_in   : (3D,)    in_proj bias
    w_out_t: (D, D)   out_proj weight, pre-transposed
    b_out  : (D,)     out_proj bias
    """
    B, S, D = tokens.shape
    hd = D // num_heads
    scale = 1.0 / math.sqrt(hd)

    # Host-side (one-time) prep: fold the softmax scale into the Q columns/bias of
    # the fused in-projection.  No weight replication across batch or heads.
    col_scale = jnp.concatenate([jnp.full((D,), scale, jnp.float32),
                                 jnp.ones((2 * D,), jnp.float32)])
    w_in_scaled = w_in_t * col_scale[None, :]                    # (D, 3D)
    b_in_scaled = (b_in * col_scale).reshape(1, 3 * D)           # (1, 3D)
    b_out2d = b_out.reshape(1, D)                                # (1, D)

    kernel = partial(_mta_kernel, num_heads=num_heads)

    # Grid-less: whole problem (~20 KB) resides in VMEM for one invocation.
    # For non-trivial B/S: add a ("parallel",) grid over batch and BlockSpec
    # tiling with pltpu.CompilerParams(vmem_limit_bytes=...) (v7x: 2 TCs, 64 MiB VMEM).
    return pl.pallas_call(
        kernel,
        out_shape=jax.ShapeDtypeStruct((B, D), jnp.float32),
        in_specs=[pl.BlockSpec(memory_space=pltpu.MemorySpace.VMEM)
                  for _ in range(5)],
        out_specs=pl.BlockSpec(memory_space=pltpu.MemorySpace.VMEM),
    )(tokens, w_in_scaled, b_in_scaled, w_out_t, b_out2d)


def _reference(tokens, w_in_t, b_in, w_out_t, b_out, num_heads):
    """Pure-JAX replica of torch.nn.MultiheadAttention(self-attn) + mean(dim=1)."""
    B, S, D = tokens.shape
    hd = D // num_heads
    qkv = tokens @ w_in_t + b_in                                     # (B, S, 3D)
    q, k, v = jnp.split(qkv, 3, axis=-1)

    def split_heads(t):
        return t.reshape(B, S, num_heads, hd).transpose(0, 2, 1, 3)  # (B, H, S, hd)

    q, k, v = split_heads(q), split_heads(k), split_heads(v)
    scores = jnp.einsum("bhqd,bhkd->bhqk", q, k) / math.sqrt(hd)
    p = jax.nn.softmax(scores, axis=-1)
    o = jnp.einsum("bhqk,bhkd->bhqd", p, v)                          # (B, H, S, hd)
    o = o.transpose(0, 2, 1, 3).reshape(B, S, D)
    out = o @ w_out_t + b_out
    return out.mean(axis=1)


if __name__ == "__main__":
    key = jax.random.PRNGKey(0)
    k_tok, k_win, k_bin, k_wout, k_bout = jax.random.split(key, 5)

    # deterministic synthetic parameters (shapes implied by nn.MultiheadAttention(dim, 4)):
    #   in_proj_weight : (3D, D) -> stored transposed as (D, 3D)
    #   in_proj_bias   : (3D,)
    #   out_proj.weight: (D, D)  -> stored transposed as (D, D)
    #   out_proj.bias  : (D,)
    tokens = jax.random.normal(k_tok, (BATCH, SEQ, DIM), dtype=jnp.float32)
    w_in_t = jax.random.normal(k_win, (DIM, 3 * DIM), dtype=jnp.float32) * 0.05
    b_in = jax.random.normal(k_bin, (3 * DIM,), dtype=jnp.float32) * 0.05
    w_out_t = jax.random.normal(k_wout, (DIM, DIM), dtype=jnp.float32) * 0.05
    b_out = jax.random.normal(k_bout, (DIM,), dtype=jnp.float32) * 0.05

    out = multi_token_attention(tokens, w_in_t, b_in, w_out_t, b_out)
    out = jax.block_until_ready(out)

    ref = _reference(tokens, w_in_t, b_in, w_out_t, b_out, NUM_HEADS)
    assert out.shape == (BATCH, DIM)
    # exact softmax divide -> tight tolerance vs the JAX/torch reference
    assert jnp.allclose(out, ref, atol=1e-4, rtol=1e-4), "mismatch vs JAX reference"

    print("KERNEL_OK")
</pallas_src>

<mosaic_0001>
module attributes {stable_mosaic.version = 11 : i64} {
  func.func @_mta_kernel(%arg0: memref<2x8x32xf32, #tpu.memory_space<vmem>>, %arg1: memref<32x96xf32, #tpu.memory_space<vmem>>, %arg2: memref<1x96xf32, #tpu.memory_space<vmem>>, %arg3: memref<32x32xf32, #tpu.memory_space<vmem>>, %arg4: memref<1x32xf32, #tpu.memory_space<vmem>>, %arg5: memref<2x32xf32, #tpu.memory_space<vmem>>) attributes {dimension_semantics = [], scalar_prefetch = 0 : i64, scratch_operands = 0 : i64, tpu.core_type = #tpu.core_type<tc>} {
    %c0 = arith.constant 0 : index
    %c0_0 = arith.constant 0 : index
    %c0_1 = arith.constant 0 : index
    %0 = vector.load %arg0[%c0, %c0_0, %c0_1] : memref<2x8x32xf32, #tpu.memory_space<vmem>>, vector<2x8x32xf32>
    %1 = vector.shape_cast %0 : vector<2x8x32xf32> to vector<16x32xf32>
    %c0_2 = arith.constant 0 : index
    %c0_3 = arith.constant 0 : index
    %2 = vector.load %arg1[%c0_2, %c0_3] : memref<32x96xf32, #tpu.memory_space<vmem>>, vector<32x96xf32>
    %cst = arith.constant dense<0.000000e+00> : vector<16x96xf32>
    %3 = tpu.matmul %1, %2, %cst {dimension_numbers = #tpu.dot_dimension_numbers<[1], [0], [0], [1], [0, 0, 1, 1], [], []>} : vector<16x32xf32>, vector<32x96xf32>, vector<16x96xf32> -> vector<16x96xf32>
    %c0_4 = arith.constant 0 : index
    %c0_5 = arith.constant 0 : index
    %4 = vector.load %arg2[%c0_4, %c0_5] : memref<1x96xf32, #tpu.memory_space<vmem>>, vector<1x96xf32>
    %5 = vector.broadcast %4 : vector<1x96xf32> to vector<16x96xf32>
    %6 = arith.addf %3, %5 : vector<16x96xf32>
    %7 = vector.extract_strided_slice %6 {offsets = [0, 0], sizes = [16, 32], strides = [1, 1]} : vector<16x96xf32> to vector<16x32xf32>
    %8 = vector.shape_cast %7 : vector<16x32xf32> to vector<2x8x32xf32>
    %9 = vector.extract_strided_slice %6 {offsets = [0, 32], sizes = [16, 32], strides = [1, 1]} : vector<16x96xf32> to vector<16x32xf32>
    %10 = vector.shape_cast %9 : vector<16x32xf32> to vector<2x8x32xf32>
    %11 = vector.extract_strided_slice %6 {offsets = [0, 64], sizes = [16, 32], strides = [1, 1]} : vector<16x96xf32> to vector<16x32xf32>
    %12 = vector.shape_cast %11 : vector<16x32xf32> to vector<2x8x32xf32>
    %cst_6 = arith.constant 0.000000e+00 : f32
    %13 = vector.broadcast %cst_6 : f32 to vector<2x32xf32>
    %14 = vector.extract_strided_slice %8 {offsets = [0, 0, 0], sizes = [2, 8, 8], strides = [1, 1, 1]} : vector<2x8x32xf32> to vector<2x8x8xf32>
    %15 = vector.extract_strided_slice %10 {offsets = [0, 0, 0], sizes = [2, 8, 8], strides = [1, 1, 1]} : vector<2x8x32xf32> to vector<2x8x8xf32>
    %16 = vector.extract_strided_slice %12 {offsets = [0, 0, 0], sizes = [2, 8, 8], strides = [1, 1, 1]} : vector<2x8x32xf32> to vector<2x8x8xf32>
    "tpu.trace_start"() <{level = 10 : i32, message = "bqd,bkd->bqk"}> : () -> ()
    %cst_7 = arith.constant dense<0.000000e+00> : vector<2x8x8xf32>
    %17 = tpu.matmul %14, %15, %cst_7 {dimension_numbers = #tpu.dot_dimension_numbers<[2], [2], [1], [1], [0, 0, 0, 1, 1, 1], [0], [0]>} : vector<2x8x8xf32>, vector<2x8x8xf32>, vector<2x8x8xf32> -> vector<2x8x8xf32>
    "tpu.trace_stop"() : () -> ()
    %cst_8 = arith.constant dense<0xFF800000> : vector<2x8xf32>
    %18 = vector.multi_reduction <maximumf>, %17, %cst_8 [2] : vector<2x8x8xf32> to vector<2x8xf32>
    %19 = vector.shape_cast %18 : vector<2x8xf32> to vector<2x8x1xf32>
    %20 = vector.broadcast %19 : vector<2x8x1xf32> to vector<2x8x8xf32>
    %21 = arith.subf %17, %20 : vector<2x8x8xf32>
    %22 = math.exp %21 : vector<2x8x8xf32>
    %cst_9 = arith.constant dense<0.000000e+00> : vector<2x8xf32>
    %23 = vector.multi_reduction <add>, %22, %cst_9 [2] : vector<2x8x8xf32> to vector<2x8xf32>
    %24 = vector.shape_cast %23 : vector<2x8xf32> to vector<2x8x1xf32>
    %25 = vector.broadcast %24 : vector<2x8x1xf32> to vector<2x8x8xf32>
    %26 = arith.divf %22, %25 : vector<2x8x8xf32>
    %cst_10 = arith.constant dense<0.000000e+00> : vector<2x8xf32>
    %27 = vector.multi_reduction <add>, %26, %cst_10 [1] : vector<2x8x8xf32> to vector<2x8xf32>
    %28 = vector.shape_cast %27 : vector<2x8xf32> to vector<2x1x8xf32>
    %cst_11 = arith.constant 8.000000e+00 : f32
    %29 = vector.broadcast %cst_11 : f32 to vector<2x1x8xf32>
    %30 = arith.divf %28, %29 : vector<2x1x8xf32>
    "tpu.trace_start"() <{level = 10 : i32, message = "bqk,bkd->bqd"}> : () -> ()
    %cst_12 = arith.constant dense<0.000000e+00> : vector<2x1x8xf32>
    %31 = tpu.matmul %30, %16, %cst_12 {dimension_numbers = #tpu.dot_dimension_numbers<[2], [1], [1], [2], [0, 0, 0, 1, 1, 2], [0], [0]>} : vector<2x1x8xf32>, vector<2x8x8xf32>, vector<2x1x8xf32> -> vector<2x1x8xf32>
    "tpu.trace_stop"() : () -> ()
    %32 = vector.shape_cast %31 : vector<2x1x8xf32> to vector<2x8xf32>
    %c0_13 = arith.constant 0 : index
    %c0_14 = arith.constant 0 : index
    %33 = vector.load %arg3[%c0_13, %c0_14] : memref<32x32xf32, #tpu.memory_space<vmem>>, vector<8x32xf32>
    %cst_15 = arith.constant dense<0.000000e+00> : vector<2x32xf32>
    %34 = tpu.matmul %32, %33, %cst_15 {dimension_numbers = #tpu.dot_dimension_numbers<[1], [0], [0], [1], [0, 0, 1, 1], [], []>} : vector<2x8xf32>, vector<8x32xf32>, vector<2x32xf32> -> vector<2x32xf32>
    %35 = arith.addf %13, %34 : vector<2x32xf32>
    %36 = vector.extract_strided_slice %8 {offsets = [0, 0, 8], sizes = [2, 8, 8], strides = [1, 1, 1]} : vector<2x8x32xf32> to vector<2x8x8xf32>
    %37 = vector.extract_strided_slice %10 {offsets = [0, 0, 8], sizes = [2, 8, 8], strides = [1, 1, 1]} : vector<2x8x32xf32> to vector<2x8x8xf32>
    %38 = vector.extract_strided_slice %12 {offsets = [0, 0, 8], sizes = [2, 8, 8], strides = [1, 1, 1]} : vector<2x8x32xf32> to vector<2x8x8xf32>
    "tpu.trace_start"() <{level = 10 : i32, message = "bqd,bkd->bqk"}> : () -> ()
    %cst_16 = arith.constant dense<0.000000e+00> : vector<2x8x8xf32>
    %39 = tpu.matmul %36, %37, %cst_16 {dimension_numbers = #tpu.dot_dimension_numbers<[2], [2], [1], [1], [0, 0, 0, 1, 1, 1], [0], [0]>} : vector<2x8x8xf32>, vector<2x8x8xf32>, vector<2x8x8xf32> -> vector<2x8x8xf32>
    "tpu.trace_stop"() : () -> ()
    %cst_17 = arith.constant dense<0xFF800000> : vector<2x8xf32>
    %40 = vector.multi_reduction <maximumf>, %39, %cst_17 [2] : vector<2x8x8xf32> to vector<2x8xf32>
    %41 = vector.shape_cast %40 : vector<2x8xf32> to vector<2x8x1xf32>
    %42 = vector.broadcast %41 : vector<2x8x1xf32> to vector<2x8x8xf32>
    %43 = arith.subf %39, %42 : vector<2x8x8xf32>
    %44 = math.exp %43 : vector<2x8x8xf32>
    %cst_18 = arith.constant dense<0.000000e+00> : vector<2x8xf32>
    %45 = vector.multi_reduction <add>, %44, %cst_18 [2] : vector<2x8x8xf32> to vector<2x8xf32>
    %46 = vector.shape_cast %45 : vector<2x8xf32> to vector<2x8x1xf32>
    %47 = vector.broadcast %46 : vector<2x8x1xf32> to vector<2x8x8xf32>
    %48 = arith.divf %44, %47 : vector<2x8x8xf32>
    %cst_19 = arith.constant dense<0.000000e+00> : vector<2x8xf32>
    %49 = vector.multi_reduction <add>, %48, %cst_19 [1] : vector<2x8x8xf32> to vector<2x8xf32>
    %50 = vector.shape_cast %49 : vector<2x8xf32> to vector<2x1x8xf32>
    %cst_20 = arith.constant 8.000000e+00 : f32
    %51 = vector.broadcast %cst_20 : f32 to vector<2x1x8xf32>
    %52 = arith.divf %50, %51 : vector<2x1x8xf32>
    "tpu.trace_start"() <{level = 10 : i32, message = "bqk,bkd->bqd"}> : () -> ()
    %cst_21 = arith.constant dense<0.000000e+00> : vector<2x1x8xf32>
    %53 = tpu.matmul %52, %38, %cst_21 {dimension_numbers = #tpu.dot_dimension_numbers<[2], [1], [1], [2], [0, 0, 0, 1, 1, 2], [0], [0]>} : vector<2x1x8xf32>, vector<2x8x8xf32>, vector<2x1x8xf32> -> vector<2x1x8xf32>
    "tpu.trace_stop"() : () -> ()
    %54 = vector.shape_cast %53 : vector<2x1x8xf32> to vector<2x8xf32>
    %c8 = arith.constant 8 : index
    %c0_22 = arith.constant 0 : index
    %55 = vector.load %arg3[%c8, %c0_22] : memref<32x32xf32, #tpu.memory_space<vmem>>, vector<8x32xf32>
    %cst_23 = arith.constant dense<0.000000e+00> : vector<2x32xf32>
    %56 = tpu.matmul %54, %55, %cst_23 {dimension_numbers = #tpu.dot_dimension_numbers<[1], [0], [0], [1], [0, 0, 1, 1], [], []>} : vector<2x8xf32>, vector<8x32xf32>, vector<2x32xf32> -> vector<2x32xf32>
    %57 = arith.addf %35, %56 : vector<2x32xf32>
    %58 = vector.extract_strided_slice %8 {offsets = [0, 0, 16], sizes = [2, 8, 8], strides = [1, 1, 1]} : vector<2x8x32xf32> to vector<2x8x8xf32>
    %59 = vector.extract_strided_slice %10 {offsets = [0, 0, 16], sizes = [2, 8, 8], strides = [1, 1, 1]} : vector<2x8x32xf32> to vector<2x8x8xf32>
    %60 = vector.extract_strided_slice %12 {offsets = [0, 0, 16], sizes = [2, 8, 8], strides = [1, 1, 1]} : vector<2x8x32xf32> to vector<2x8x8xf32>
    "tpu.trace_start"() <{level = 10 : i32, message = "bqd,bkd->bqk"}> : () -> ()
    %cst_24 = arith.constant dense<0.000000e+00> : vector<2x8x8xf32>
    %61 = tpu.matmul %58, %59, %cst_24 {dimension_numbers = #tpu.dot_dimension_numbers<[2], [2], [1], [1], [0, 0, 0, 1, 1, 1], [0], [0]>} : vector<2x8x8xf32>, vector<2x8x8xf32>, vector<2x8x8xf32> -> vector<2x8x8xf32>
    "tpu.trace_stop"() : () -> ()
    %cst_25 = arith.constant dense<0xFF800000> : vector<2x8xf32>
    %62 = vector.multi_reduction <maximumf>, %61, %cst_25 [2] : vector<2x8x8xf32> to vector<2x8xf32>
    %63 = vector.shape_cast %62 : vector<2x8xf32> to vector<2x8x1xf32>
    %64 = vector.broadcast %63 : vector<2x8x1xf32> to vector<2x8x8xf32>
    %65 = arith.subf %61, %64 : vector<2x8x8xf32>
    %66 = math.exp %65 : vector<2x8x8xf32>
    %cst_26 = arith.constant dense<0.000000e+00> : vector<2x8xf32>
    %67 = vector.multi_reduction <add>, %66, %cst_26 [2] : vector<2x8x8xf32> to vector<2x8xf32>
    %68 = vector.shape_cast %67 : vector<2x8xf32> to vector<2x8x1xf32>
    %69 = vector.broadcast %68 : vector<2x8x1xf32> to vector<2x8x8xf32>
    %70 = arith.divf %66, %69 : vector<2x8x8xf32>
    %cst_27 = arith.constant dense<0.000000e+00> : vector<2x8xf32>
    %71 = vector.multi_reduction <add>, %70, %cst_27 [1] : vector<2x8x8xf32> to vector<2x8xf32>
    %72 = vector.shape_cast %71 : vector<2x8xf32> to vector<2x1x8xf32>
    %cst_28 = arith.constant 8.000000e+00 : f32
    %73 = vector.broadcast %cst_28 : f32 to vector<2x1x8xf32>
    %74 = arith.divf %72, %73 : vector<2x1x8xf32>
    "tpu.trace_start"() <{level = 10 : i32, message = "bqk,bkd->bqd"}> : () -> ()
    %cst_29 = arith.constant dense<0.000000e+00> : vector<2x1x8xf32>
    %75 = tpu.matmul %74, %60, %cst_29 {dimension_numbers = #tpu.dot_dimension_numbers<[2], [1], [1], [2], [0, 0, 0, 1, 1, 2], [0], [0]>} : vector<2x1x8xf32>, vector<2x8x8xf32>, vector<2x1x8xf32> -> vector<2x1x8xf32>
    "tpu.trace_stop"() : () -> ()
    %76 = vector.shape_cast %75 : vector<2x1x8xf32> to vector<2x8xf32>
    %c16 = arith.constant 16 : index
    %c0_30 = arith.constant 0 : index
    %77 = vector.load %arg3[%c16, %c0_30] : memref<32x32xf32, #tpu.memory_space<vmem>>, vector<8x32xf32>
    %cst_31 = arith.constant dense<0.000000e+00> : vector<2x32xf32>
    %78 = tpu.matmul %76, %77, %cst_31 {dimension_numbers = #tpu.dot_dimension_numbers<[1], [0], [0], [1], [0, 0, 1, 1], [], []>} : vector<2x8xf32>, vector<8x32xf32>, vector<2x32xf32> -> vector<2x32xf32>
    %79 = arith.addf %57, %78 : vector<2x32xf32>
    %80 = vector.extract_strided_slice %8 {offsets = [0, 0, 24], sizes = [2, 8, 8], strides = [1, 1, 1]} : vector<2x8x32xf32> to vector<2x8x8xf32>
    %81 = vector.extract_strided_slice %10 {offsets = [0, 0, 24], sizes = [2, 8, 8], strides = [1, 1, 1]} : vector<2x8x32xf32> to vector<2x8x8xf32>
    %82 = vector.extract_strided_slice %12 {offsets = [0, 0, 24], sizes = [2, 8, 8], strides = [1, 1, 1]} : vector<2x8x32xf32> to vector<2x8x8xf32>
    "tpu.trace_start"() <{level = 10 : i32, message = "bqd,bkd->bqk"}> : () -> ()
    %cst_32 = arith.constant dense<0.000000e+00> : vector<2x8x8xf32>
    %83 = tpu.matmul %80, %81, %cst_32 {dimension_numbers = #tpu.dot_dimension_numbers<[2], [2], [1], [1], [0, 0, 0, 1, 1, 1], [0], [0]>} : vector<2x8x8xf32>, vector<2x8x8xf32>, vector<2x8x8xf32> -> vector<2x8x8xf32>
    "tpu.trace_stop"() : () -> ()
    %cst_33 = arith.constant dense<0xFF800000> : vector<2x8xf32>
    %84 = vector.multi_reduction <maximumf>, %83, %cst_33 [2] : vector<2x8x8xf32> to vector<2x8xf32>
    %85 = vector.shape_cast %84 : vector<2x8xf32> to vector<2x8x1xf32>
    %86 = vector.broadcast %85 : vector<2x8x1xf32> to vector<2x8x8xf32>
    %87 = arith.subf %83, %86 : vector<2x8x8xf32>
    %88 = math.exp %87 : vector<2x8x8xf32>
    %cst_34 = arith.constant dense<0.000000e+00> : vector<2x8xf32>
    %89 = vector.multi_reduction <add>, %88, %cst_34 [2] : vector<2x8x8xf32> to vector<2x8xf32>
    %90 = vector.shape_cast %89 : vector<2x8xf32> to vector<2x8x1xf32>
    %91 = vector.broadcast %90 : vector<2x8x1xf32> to vector<2x8x8xf32>
    %92 = arith.divf %88, %91 : vector<2x8x8xf32>
    %cst_35 = arith.constant dense<0.000000e+00> : vector<2x8xf32>
    %93 = vector.multi_reduction <add>, %92, %cst_35 [1] : vector<2x8x8xf32> to vector<2x8xf32>
    %94 = vector.shape_cast %93 : vector<2x8xf32> to vector<2x1x8xf32>
    %cst_36 = arith.constant 8.000000e+00 : f32
    %95 = vector.broadcast %cst_36 : f32 to vector<2x1x8xf32>
    %96 = arith.divf %94, %95 : vector<2x1x8xf32>
    "tpu.trace_start"() <{level = 10 : i32, message = "bqk,bkd->bqd"}> : () -> ()
    %cst_37 = arith.constant dense<0.000000e+00> : vector<2x1x8xf32>
    %97 = tpu.matmul %96, %82, %cst_37 {dimension_numbers = #tpu.dot_dimension_numbers<[2], [1], [1], [2], [0, 0, 0, 1, 1, 2], [0], [0]>} : vector<2x1x8xf32>, vector<2x8x8xf32>, vector<2x1x8xf32> -> vector<2x1x8xf32>
    "tpu.trace_stop"() : () -> ()
    %98 = vector.shape_cast %97 : vector<2x1x8xf32> to vector<2x8xf32>
    %c24 = arith.constant 24 : index
    %c0_38 = arith.constant 0 : index
    %99 = vector.load %arg3[%c24, %c0_38] : memref<32x32xf32, #tpu.memory_space<vmem>>, vector<8x32xf32>
    %cst_39 = arith.constant dense<0.000000e+00> : vector<2x32xf32>
    %100 = tpu.matmul %98, %99, %cst_39 {dimension_numbers = #tpu.dot_dimension_numbers<[1], [0], [0], [1], [0, 0, 1, 1], [], []>} : vector<2x8xf32>, vector<8x32xf32>, vector<2x32xf32> -> vector<2x32xf32>
    %101 = arith.addf %79, %100 : vector<2x32xf32>
    %c0_40 = arith.constant 0 : index
    %c0_41 = arith.constant 0 : index
    %102 = vector.load %arg4[%c0_40, %c0_41] : memref<1x32xf32, #tpu.memory_space<vmem>>, vector<1x32xf32>
    %103 = vector.broadcast %102 : vector<1x32xf32> to vector<2x32xf32>
    %104 = arith.addf %101, %103 : vector<2x32xf32>
    %c0_42 = arith.constant 0 : index
    %c0_43 = arith.constant 0 : index
    %105 = vector.load %arg5[%c0_42, %c0_43] : memref<2x32xf32, #tpu.memory_space<vmem>>, vector<2x32xf32>
    tpu.vector_store %arg5[%c0_42, %c0_43], %104 {strides = array<i32>} : memref<2x32xf32, #tpu.memory_space<vmem>>, vector<2x32xf32>,
    return
  }
}

</mosaic_0001>

<llo_original>
// kernel: tpu_custom_call.1
$region0: #{tpu_custom_call.1}
  #allocation0 [shape = 'u32[]', space=smem, size = 0x4, offset = 0x4, fixed_abs, tag = 'smem constant byte address 0x4 - core index']
  #allocation1 [shape = 'u32[72,128]{1,0:T(1,128)}', space=vmem, size = 0x9000, scoped, tag = 'internal scratch']
  %s0 = inlined_call_operand.hbm [shape: f32[2,8,32], index: 0, kind: input, shape index: {}]
  %s1 = inlined_call_operand.hbm [shape: f32[32,96], index: 1, kind: input, shape index: {}]
  %s2 = inlined_call_operand.vmem [shape: f32[1,96], index: 2, kind: input, shape index: {}]
  %s3 = inlined_call_operand.hbm [shape: f32[32,32], index: 3, kind: input, shape index: {}]
  %s4 = inlined_call_operand.vmem [shape: f32[1,32], index: 4, kind: input, shape index: {}]
  %s5 = inlined_call_operand.hbm [shape: f32[2,32], index: 5, kind: output, shape index: {}]
  %s6 = sld [smem:[#allocation0]]
  $region42: #{tpu_custom_call.1} parent=0
    _
  %s8 = ssub.s32 1, %s6
  %s9 = scalar_select 0, %s8, %s6
  $region1: #{tpu_custom_call.1} parent=0
    #allocation2 [shape = 'u8[8192]{0}', space=vmem, size = 0x2000, scoped, tag = 'input window, operand 0, single buffered']
    #allocation3 [shape = 's32[1]{0}', space=sflag, size = 0x4, scoped, tag = 'scoped memory for tpu_custom_call.1']
    #allocation4 [shape = 's32[1]{0}', space=sflag, size = 0x4, scoped, tag = 'scoped memory for tpu_custom_call.1']
    #allocation5 [shape = 'u8[16384]{0}', space=vmem, size = 0x4000, scoped, tag = 'input window, operand 1, single buffered']
    #allocation6 [shape = 's32[1]{0}', space=sflag, size = 0x4, scoped, tag = 'scoped memory for tpu_custom_call.1']
    #allocation7 [shape = 'u8[16384]{0}', space=vmem, size = 0x4000, scoped, tag = 'input window, operand 3, single buffered']
    #allocation8 [shape = 'u8[1024]{0}', space=vmem, size = 0x400, scoped, tag = 'output window, operand 0, single buffered']
    %10 = vsyncpa [#allocation3], 0
    %11 = vsyncpa [#allocation6], 0
    %12 = vsyncpa [#allocation4], 0
    // Predicated region
    $region2: #{tpu_custom_call.1} parent=1 // pred_check
      _
    $region3: #{tpu_custom_call.1} parent=1 // pred_check_branch
      %14 = sbr.rel (0) target = $region5
    $region4: #{tpu_custom_call.1} parent=1 // pred_region
      %16 = vsyncadd [#allocation3], 0
      %s17 = sshll.u32 %s0, 4
      %s18 = int_to_ptr.hbm [resolvable:$true] %s17
      %s19 = sshll.u32 [#allocation2], 4
      %s20 = int_to_ptr.vmem [resolvable:$true] %s19
      %25 = dma.hbm_to_vmem [thread:$0]  %s18, 256, %s20, [#allocation3], 128, 128, 8
    $region5: #{tpu_custom_call.1} parent=1 // pred_fallthru
      _
    // Predicated region
    $region6: #{tpu_custom_call.1} parent=1 // pred_check
      _
    $region7: #{tpu_custom_call.1} parent=1 // pred_check_branch
      %27 = sbr.rel (0) target = $region9
    $region8: #{tpu_custom_call.1} parent=1 // pred_region
      %29 = vsyncadd [#allocation6], 0
      %s30 = sshll.u32 %s1, 4
      %s31 = int_to_ptr.hbm [resolvable:$true] %s30
      %s32 = sshll.u32 [#allocation5], 4
      %s33 = int_to_ptr.vmem [resolvable:$true] %s32
      %38 = dma.hbm_to_vmem [thread:$0]  %s31, 512, %s33, [#allocation6], 128, 128, 8
    $region9: #{tpu_custom_call.1} parent=1 // pred_fallthru
      _
    // Predicated region
    $region10: #{tpu_custom_call.1} parent=1 // pred_check
      _
    $region11: #{tpu_custom_call.1} parent=1 // pred_check_branch
      %40 = sbr.rel (0) target = $region13
    $region12: #{tpu_custom_call.1} parent=1 // pred_region
      _
    $region13: #{tpu_custom_call.1} parent=1 // pred_fallthru
      _
    // Predicated region
    $region14: #{tpu_custom_call.1} parent=1 // pred_check
      _
    $region15: #{tpu_custom_call.1} parent=1 // pred_check_branch
      %42 = sbr.rel (0) target = $region17
    $region16: #{tpu_custom_call.1} parent=1 // pred_region
      %44 = vsyncadd [#allocation6], 0
      %s45 = sshll.u32 %s3, 4
      %s46 = int_to_ptr.hbm [resolvable:$true] %s45
      %s47 = sshll.u32 [#allocation7], 4
      %s48 = int_to_ptr.vmem [resolvable:$true] %s47
      %53 = dma.hbm_to_vmem [thread:$0]  %s46, 512, %s48, [#allocation6], 128, 128, 8
    $region17: #{tpu_custom_call.1} parent=1 // pred_fallthru
      _
    // Predicated region
    $region18: #{tpu_custom_call.1} parent=1 // pred_check
      _
    $region19: #{tpu_custom_call.1} parent=1 // pred_check_branch
      %55 = sbr.rel (0) target = $region21
    $region20: #{tpu_custom_call.1} parent=1 // pred_region
      _
    $region21: #{tpu_custom_call.1} parent=1 // pred_fallthru
      _
    // Predicated region
    $region22: #{tpu_custom_call.1} parent=1 // pred_check
      _
    $region23: #{tpu_custom_call.1} parent=1 // pred_check_branch
      %57 = sbr.rel (0) target = $region25
    $region24: #{tpu_custom_call.1} parent=1 // pred_region
      %59 = dma.done [#allocation3], 256
    $region25: #{tpu_custom_call.1} parent=1 // pred_fallthru
      _
    // Predicated region
    $region26: #{tpu_custom_call.1} parent=1 // pred_check
      _
    $region27: #{tpu_custom_call.1} parent=1 // pred_check_branch
      %61 = sbr.rel (0) target = $region29
    $region28: #{tpu_custom_call.1} parent=1 // pred_region
      %63 = dma.done [#allocation6], 512
    $region29: #{tpu_custom_call.1} parent=1 // pred_fallthru
      _
    // Predicated region
    $region30: #{tpu_custom_call.1} parent=1 // pred_check
      _
    $region31: #{tpu_custom_call.1} parent=1 // pred_check_branch
      %65 = sbr.rel (0) target = $region33
    $region32: #{tpu_custom_call.1} parent=1 // pred_region
      %67 = dma.done [#allocation6], 512
    $region33: #{tpu_custom_call.1} parent=1 // pred_fallthru
      _
    %v68 = vld [vmem:[#allocation2] sm:$0xff]
    %v69 = vld [vmem:[#allocation2 + $0x8] sm:$0xff]
    %v70 = vld [vmem:[#allocation5] sm:$0xff]
    %v71 = vld [vmem:[#allocation5 + $0x8] sm:$0xff]
    %v72 = vld [vmem:[#allocation5 + $0x10] sm:$0xff]
    %v73 = vld [vmem:[#allocation5 + $0x18] sm:$0xff]
    %v74 = vld [vmem:[%s2] sm:$0x1]
    %v76 = vperm.slane %v74, 0
    %vm78 = vcmask 261120
    %v80 = vsel %vm78, %v68, 0
    %v83 = vsel %vm78, %v69, 0
    %85 = vmatpush.msra.mxu0 0.0
    %86 = vmatpush.msra.mxu0 0.0
    %87 = vmatpush.msra.mxu0 0.0
    %88 = vmatpush.msra.mxu0 0.0
    %89 = vmatpush.msra.mxu0 0.0
    %90 = vmatpush.msra.mxu0 0.0
    %91 = vmatpush.msra.mxu0 0.0
    %92 = vmatpush.msra.mxu0 0.0
    %93 = vmatpush.msra.mxu0 0.0
    %94 = vmatpush.msra.mxu0 0.0
    %95 = vmatpush.msra.mxu0 0.0
    %96 = vmatpush.msra.mxu0 0.0
    %97 = vmatpush.msra.mxu0 %v73
    %98 = vmatpush.msra.mxu0 %v72
    %99 = vmatpush.msra.mxu0 %v71
    %100 = vmatpush.msra.mxu0 %v70
    %101 = vmatmul.f32.gmra.mxu0 %v80
    %v102 = vpop.f32.mrf.mxu0
    %v103 = vadd.f32 %v76, %v102
    %104 = vmatmul.f32.gmra.mxu0 %v83
    %v105 = vpop.f32.mrf.mxu0
    %v106 = vadd.f32 %v76, %v105
    %107 = vdwg.mxu0
    %109 = vrot.lane.b32.xlu0 %v103, 96
    %v110 = vpop.permute.xlu0 %109
    %vm111 = vcmask 64512
    %v112 = vsel %vm111, %v103, 0
    %v114 = vsel %vm111, %v110, 0
    %116 = vmatpush.xpose.msra.mxu0 0.0
    %117 = vmatpush.xpose.msra.mxu0 0.0
    %118 = vmatpush.xpose.msra.mxu0 0.0
    %119 = vmatpush.xpose.msra.mxu0 0.0
    %120 = vmatpush.xpose.msra.mxu0 0.0
    %121 = vmatpush.xpose.msra.mxu0 0.0
    %122 = vmatpush.xpose.msra.mxu0 0.0
    %123 = vmatpush.xpose.msra.mxu0 0.0
    %124 = vmatpush.xpose.msra.mxu0 0.0
    %125 = vmatpush.xpose.msra.mxu0 0.0
    %126 = vmatpush.xpose.msra.mxu0 0.0
    %127 = vmatpush.xpose.msra.mxu0 0.0
    %128 = vmatpush.xpose.msra.mxu0 0.0
    %129 = vmatpush.xpose.msra.mxu0 0.0
    %130 = vmatpush.xpose.msra.mxu0 0.0
    %131 = vmatpush.xpose.msra.mxu0 %v114
    %132 = vmatmul.f32.gmra.mxu0 %v112
    %v133 = vpop.f32.mrf.mxu0
    %v134 = vadd.f32 0.0, %v133
    %135 = vdwg.mxu0
    %137 = vrot.lane.b32.xlu0 %v106, 96
    %v138 = vpop.permute.xlu0 %137
    %v139 = vsel %vm111, %v106, 0
    %v141 = vsel %vm111, %v138, 0
    %143 = vmatpush.xpose.msra.mxu0 0.0
    %144 = vmatpush.xpose.msra.mxu0 0.0
    %145 = vmatpush.xpose.msra.mxu0 0.0
    %146 = vmatpush.xpose.msra.mxu0 0.0
    %147 = vmatpush.xpose.msra.mxu0 0.0
    %148 = vmatpush.xpose.msra.mxu0 0.0
    %149 = vmatpush.xpose.msra.mxu0 0.0
    %150 = vmatpush.xpose.msra.mxu0 0.0
    %151 = vmatpush.xpose.msra.mxu0 0.0
    %152 = vmatpush.xpose.msra.mxu0 0.0
    %153 = vmatpush.xpose.msra.mxu0 0.0
    %154 = vmatpush.xpose.msra.mxu0 0.0
    %155 = vmatpush.xpose.msra.mxu0 0.0
    %156 = vmatpush.xpose.msra.mxu0 0.0
    %157 = vmatpush.xpose.msra.mxu0 0.0
    %158 = vmatpush.xpose.msra.mxu0 %v141
    %159 = vmatmul.f32.gmra.mxu0 %v139
    %v160 = vpop.f32.mrf.mxu0
    %v161 = vadd.f32 0.0, %v160
    %162 = vdwg.mxu0
    %v163 = vsel %vm111, %v134, -inf
    %164 = vmax.xlane.f32.xlu0 %v163
    %v165 = vpop.xlane.xlu0 %164
    %v166 = vsel %vm111, %v161, -inf
    %167 = vmax.xlane.f32.xlu0 %v166
    %v168 = vpop.xlane.xlu0 %167
    %v169 = vsub.f32 %v134, %v165
    %v170 = vsub.f32 %v161, %v168
    %v171 = vmul.f32 %v169, 1.442695
    %v172 = vpow.pop %v171
    %v173 = vmul.f32 %v170, 1.442695
    %v174 = vpow.pop %v173
    %v175 = vsel %vm111, %v172, 0.0
    %176 = vadd.xlane.f32.xlu0 %v175
    %v177 = vpop.xlane.xlu0 %176
    %v178 = vsel %vm111, %v174, 0.0
    %179 = vadd.xlane.f32.xlu0 %v178
    %v180 = vpop.xlane.xlu0 %179
    %v181 = vrcp.pop %v177
    %v182 = vmul.f32 %v177, %v181
    %v183 = vsub.f32 1.0, %v182
    %v184 = vmul.f32 %v181, %v183
    %v185 = vadd.f32 %v181, %v184
    %vm186 = vweird.f32 %v177
    %vm187 = vweird.f32 %v181
    %vm188 = vmor %vm186, %vm187
    %v189 = vsel %vm188, %v181, %v185
    %v190 = vand.u32 2147483647, %v177
    %vm191 = vcmp.eq.f32.partialorder %v190, 8.507059e+37
    %v192 = vand.u32 %v177, 2147483648
    %v193 = vor.u32 1.1754944e-38, %v192
    %v194 = vsel %vm191, %v193, %v189
    %v195 = vmul.f32 %v172, %v194
    %v196 = vrcp.pop %v180
    %v197 = vmul.f32 %v180, %v196
    %v198 = vsub.f32 1.0, %v197
    %v199 = vmul.f32 %v196, %v198
    %v200 = vadd.f32 %v196, %v199
    %vm201 = vweird.f32 %v180
    %vm202 = vweird.f32 %v196
    %vm203 = vmor %vm201, %vm202
    %v204 = vsel %vm203, %v196, %v200
    %v205 = vand.u32 2147483647, %v180
    %vm206 = vcmp.eq.f32.partialorder %v205, 8.507059e+37
    %v207 = vand.u32 %v180, 2147483648
    %v208 = vor.u32 1.1754944e-38, %v207
    %v209 = vsel %vm206, %v208, %v204
    %v210 = vmul.f32 %v174, %v209
    %v211 = vsel %vm111, %v195, 0.0
    %v212 = vrot.slane %v211, 4
    %v213 = vadd.f32 %v211, %v212
    %v214 = vrot.slane %v213, 2
    %v215 = vadd.f32 %v213, %v214
    %v216 = vrot.slane %v215, 1
    %v217 = vadd.f32 %v215, %v216
    %v218 = vsel %vm111, %v210, 0.0
    %v219 = vrot.slane %v218, 4
    %v220 = vadd.f32 %v218, %v219
    %v221 = vrot.slane %v220, 2
    %v222 = vadd.f32 %v220, %v221
    %v223 = vrot.slane %v222, 1
    %v224 = vadd.f32 %v222, %v223
    %v225 = vrcp.pop 8.0
    %v226 = vmul.f32 8.0, %v225
    %v227 = vsub.f32 1.0, %v226
    %v228 = vmul.f32 %v225, %v227
    %v229 = vadd.f32 %v225, %v228
    %vm230 = vweird.f32 %v225
    %v231 = vsel %vm230, %v225, %v229
    %v232 = vmul.f32 %v217, %v231
    %v233 = vmul.f32 %v224, %v231
    %234 = vrot.lane.b32.xlu0 %v103, 64
    %v235 = vpop.permute.xlu0 %234
    %v238 = vsel %vm111, %v232, 0
    %240 = vmatpush.msra.mxu0 0.0
    %241 = vmatpush.msra.mxu0 0.0
    %242 = vmatpush.msra.mxu0 0.0
    %243 = vmatpush.msra.mxu0 0.0
    %244 = vmatpush.msra.mxu0 0.0
    %245 = vmatpush.msra.mxu0 0.0
    %246 = vmatpush.msra.mxu0 0.0
    %247 = vmatpush.msra.mxu0 0.0
    %248 = vmatpush.msra.mxu0 0.0
    %249 = vmatpush.msra.mxu0 0.0
    %250 = vmatpush.msra.mxu0 0.0
    %251 = vmatpush.msra.mxu0 0.0
    %252 = vmatpush.msra.mxu0 0.0
    %253 = vmatpush.msra.mxu0 0.0
    %254 = vmatpush.msra.mxu0 0.0
    %255 = vmatpush.msra.mxu0 %v235
    %256 = vmatmul.f32.gmra.mxu0 %v238
    %v257 = vpop.f32.mrf.mxu0
    %v258 = vadd.f32 0.0, %v257
    %259 = vdwg.mxu0
    %260 = vrot.lane.b32.xlu0 %v106, 64
    %v261 = vpop.permute.xlu0 %260
    %v264 = vsel %vm111, %v233, 0
    %266 = vmatpush.msra.mxu0 0.0
    %267 = vmatpush.msra.mxu0 0.0
    %268 = vmatpush.msra.mxu0 0.0
    %269 = vmatpush.msra.mxu0 0.0
    %270 = vmatpush.msra.mxu0 0.0
    %271 = vmatpush.msra.mxu0 0.0
    %272 = vmatpush.msra.mxu0 0.0
    %273 = vmatpush.msra.mxu0 0.0
    %274 = vmatpush.msra.mxu0 0.0
    %275 = vmatpush.msra.mxu0 0.0
    %276 = vmatpush.msra.mxu0 0.0
    %277 = vmatpush.msra.mxu0 0.0
    %278 = vmatpush.msra.mxu0 0.0
    %279 = vmatpush.msra.mxu0 0.0
    %280 = vmatpush.msra.mxu0 0.0
    %281 = vmatpush.msra.mxu0 %v261
    %282 = vmatmul.f32.gmra.mxu0 %v264
    %v283 = vpop.f32.mrf.mxu0
    %v284 = vadd.f32 0.0, %v283
    %285 = vdwg.mxu0
    %v286 = vld [vmem:[#allocation7] sm:$0xff]
    %287 = vrot.lane.b32.xlu0 %v103, 120
    %v288 = vpop.permute.xlu0 %287
    %289 = vrot.lane.b32.xlu0 %v103, 88
    %v290 = vpop.permute.xlu0 %289
    %v291 = vsel %vm111, %v288, 0
    %v293 = vsel %vm111, %v290, 0
    %295 = vmatpush.xpose.msra.mxu0 0.0
    %296 = vmatpush.xpose.msra.mxu0 0.0
    %297 = vmatpush.xpose.msra.mxu0 0.0
    %298 = vmatpush.xpose.msra.mxu0 0.0
    %299 = vmatpush.xpose.msra.mxu0 0.0
    %300 = vmatpush.xpose.msra.mxu0 0.0
    %301 = vmatpush.xpose.msra.mxu0 0.0
    %302 = vmatpush.xpose.msra.mxu0 0.0
    %303 = vmatpush.xpose.msra.mxu0 0.0
    %304 = vmatpush.xpose.msra.mxu0 0.0
    %305 = vmatpush.xpose.msra.mxu0 0.0
    %306 = vmatpush.xpose.msra.mxu0 0.0
    %307 = vmatpush.xpose.msra.mxu0 0.0
    %308 = vmatpush.xpose.msra.mxu0 0.0
    %309 = vmatpush.xpose.msra.mxu0 0.0
    %310 = vmatpush.xpose.msra.mxu0 %v293
    %311 = vmatmul.f32.gmra.mxu0 %v291
    %v312 = vpop.f32.mrf.mxu0
    %v313 = vadd.f32 0.0, %v312
    %314 = vdwg.mxu0
    %315 = vrot.lane.b32.xlu0 %v106, 120
    %v316 = vpop.permute.xlu0 %315
    %317 = vrot.lane.b32.xlu0 %v106, 88
    %v318 = vpop.permute.xlu0 %317
    %v319 = vsel %vm111, %v316, 0
    %v321 = vsel %vm111, %v318, 0
    %323 = vmatpush.xpose.msra.mxu0 0.0
    %324 = vmatpush.xpose.msra.mxu0 0.0
    %325 = vmatpush.xpose.msra.mxu0 0.0
    %326 = vmatpush.xpose.msra.mxu0 0.0
    %327 = vmatpush.xpose.msra.mxu0 0.0
    %328 = vmatpush.xpose.msra.mxu0 0.0
    %329 = vmatpush.xpose.msra.mxu0 0.0
    %330 = vmatpush.xpose.msra.mxu0 0.0
    %331 = vmatpush.xpose.msra.mxu0 0.0
    %332 = vmatpush.xpose.msra.mxu0 0.0
    %333 = vmatpush.xpose.msra.mxu0 0.0
    %334 = vmatpush.xpose.msra.mxu0 0.0
    %335 = vmatpush.xpose.msra.mxu0 0.0
    %336 = vmatpush.xpose.msra.mxu0 0.0
    %337 = vmatpush.xpose.msra.mxu0 0.0
    %338 = vmatpush.xpose.msra.mxu0 %v321
    %339 = vmatmul.f32.gmra.mxu0 %v319
    %v340 = vpop.f32.mrf.mxu0
    %v341 = vadd.f32 0.0, %v340
    %342 = vdwg.mxu0
    %v343 = vsel %vm111, %v313, -inf
    %344 = vmax.xlane.f32.xlu0 %v343
    %v345 = vpop.xlane.xlu0 %344
    %v346 = vsel %vm111, %v341, -inf
    %347 = vmax.xlane.f32.xlu0 %v346
    %v348 = vpop.xlane.xlu0 %347
    %v349 = vsub.f32 %v313, %v345
    %v350 = vsub.f32 %v341, %v348
    %v351 = vmul.f32 %v349, 1.442695
    %v352 = vpow.pop %v351
    %v353 = vmul.f32 %v350, 1.442695
    %v354 = vpow.pop %v353
    %v355 = vsel %vm111, %v352, 0.0
    %356 = vadd.xlane.f32.xlu0 %v355
    %v357 = vpop.xlane.xlu0 %356
    %v358 = vsel %vm111, %v354, 0.0
    %359 = vadd.xlane.f32.xlu0 %v358
    %v360 = vpop.xlane.xlu0 %359
    %v361 = vrcp.pop %v357
    %v362 = vmul.f32 %v357, %v361
    %v363 = vsub.f32 1.0, %v362
    %v364 = vmul.f32 %v361, %v363
    %v365 = vadd.f32 %v361, %v364
    %vm366 = vweird.f32 %v357
    %vm367 = vweird.f32 %v361
    %vm368 = vmor %vm366, %vm367
    %v369 = vsel %vm368, %v361, %v365
    %v370 = vand.u32 2147483647, %v357
    %vm371 = vcmp.eq.f32.partialorder %v370, 8.507059e+37
    %v372 = vand.u32 %v357, 2147483648
    %v373 = vor.u32 1.1754944e-38, %v372
    %v374 = vsel %vm371, %v373, %v369
    %v375 = vmul.f32 %v352, %v374
    %v376 = vrcp.pop %v360
    %v377 = vmul.f32 %v360, %v376
    %v378 = vsub.f32 1.0, %v377
    %v379 = vmul.f32 %v376, %v378
    %v380 = vadd.f32 %v376, %v379
    %vm381 = vweird.f32 %v360
    %vm382 = vweird.f32 %v376
    %vm383 = vmor %vm381, %vm382
    %v384 = vsel %vm383, %v376, %v380
    %v385 = vand.u32 2147483647, %v360
    %vm386 = vcmp.eq.f32.partialorder %v385, 8.507059e+37
    %v387 = vand.u32 %v360, 2147483648
    %v388 = vor.u32 1.1754944e-38, %v387
    %v389 = vsel %vm386, %v388, %v384
    %v390 = vmul.f32 %v354, %v389
    %v391 = vsel %vm111, %v375, 0.0
    %v392 = vrot.slane %v391, 4
    %v393 = vadd.f32 %v391, %v392
    %v394 = vrot.slane %v393, 2
    %v395 = vadd.f32 %v393, %v394
    %v396 = vrot.slane %v395, 1
    %v397 = vadd.f32 %v395, %v396
    %v398 = vsel %vm111, %v390, 0.0
    %v399 = vrot.slane %v398, 4
    %v400 = vadd.f32 %v398, %v399
    %v401 = vrot.slane %v400, 2
    %v402 = vadd.f32 %v400, %v401
    %v403 = vrot.slane %v402, 1
    %v404 = vadd.f32 %v402, %v403
    %v405 = vmul.f32 %v397, %v231
    %v406 = vmul.f32 %v404, %v231
    %407 = vrot.lane.b32.xlu0 %v103, 56
    %v408 = vpop.permute.xlu0 %407
    %v411 = vsel %vm111, %v405, 0
    %413 = vmatpush.msra.mxu0 0.0
    %414 = vmatpush.msra.mxu0 0.0
    %415 = vmatpush.msra.mxu0 0.0
    %416 = vmatpush.msra.mxu0 0.0
    %417 = vmatpush.msra.mxu0 0.0
    %418 = vmatpush.msra.mxu0 0.0
    %419 = vmatpush.msra.mxu0 0.0
    %420 = vmatpush.msra.mxu0 0.0
    %421 = vmatpush.msra.mxu0 0.0
    %422 = vmatpush.msra.mxu0 0.0
    %423 = vmatpush.msra.mxu0 0.0
    %424 = vmatpush.msra.mxu0 0.0
    %425 = vmatpush.msra.mxu0 0.0
    %426 = vmatpush.msra.mxu0 0.0
    %427 = vmatpush.msra.mxu0 0.0
    %428 = vmatpush.msra.mxu0 %v408
    %429 = vmatmul.f32.gmra.mxu0 %v411
    %v430 = vpop.f32.mrf.mxu0
    %v431 = vadd.f32 0.0, %v430
    %432 = vdwg.mxu0
    %433 = vrot.lane.b32.xlu0 %v106, 56
    %v434 = vpop.permute.xlu0 %433
    %v437 = vsel %vm111, %v406, 0
    %439 = vmatpush.msra.mxu0 0.0
    %440 = vmatpush.msra.mxu0 0.0
    %441 = vmatpush.msra.mxu0 0.0
    %442 = vmatpush.msra.mxu0 0.0
    %443 = vmatpush.msra.mxu0 0.0
    %444 = vmatpush.msra.mxu0 0.0
    %445 = vmatpush.msra.mxu0 0.0
    %446 = vmatpush.msra.mxu0 0.0
    %447 = vmatpush.msra.mxu0 0.0
    %448 = vmatpush.msra.mxu0 0.0
    %449 = vmatpush.msra.mxu0 0.0
    %450 = vmatpush.msra.mxu0 0.0
    %451 = vmatpush.msra.mxu0 0.0
    %452 = vmatpush.msra.mxu0 0.0
    %453 = vmatpush.msra.mxu0 0.0
    %454 = vmatpush.msra.mxu0 %v434
    %455 = vmatmul.f32.gmra.mxu0 %v437
    %v456 = vpop.f32.mrf.mxu0
    %v457 = vadd.f32 0.0, %v456
    %458 = vdwg.mxu0
    %v459 = vld [vmem:[#allocation7 + $0x8] sm:$0xff]
    %v462 = vrot.slane %v457, 7
    %vm463 = vcmask 1041409
    %v464 = vsel %vm463, %v462, %v431
    %v465 = vsel %vm111, %v464, 0
    %467 = vmatpush.msra.mxu0 0.0
    %468 = vmatpush.msra.mxu0 0.0
    %469 = vmatpush.msra.mxu0 0.0
    %470 = vmatpush.msra.mxu0 0.0
    %471 = vmatpush.msra.mxu0 0.0
    %472 = vmatpush.msra.mxu0 0.0
    %473 = vmatpush.msra.mxu0 0.0
    %474 = vmatpush.msra.mxu0 0.0
    %475 = vmatpush.msra.mxu0 0.0
    %476 = vmatpush.msra.mxu0 0.0
    %477 = vmatpush.msra.mxu0 0.0
    %478 = vmatpush.msra.mxu0 0.0
    %479 = vmatpush.msra.mxu0 0.0
    %480 = vmatpush.msra.mxu0 0.0
    %481 = vmatpush.msra.mxu0 0.0
    %482 = vmatpush.msra.mxu0 %v459
    %483 = vmatmul.f32.gmra.mxu0 %v465
    %v484 = vpop.f32.mrf.mxu0
    %v485 = vadd.f32 0.0, %v484
    %486 = vdwg.mxu0
    %v489 = vrot.slane %v284, 7
    %v490 = vsel %vm463, %v489, %v258
    %v491 = vsel %vm111, %v490, 0
    %493 = vmatpush.msra.mxu0 0.0
    %494 = vmatpush.msra.mxu0 0.0
    %495 = vmatpush.msra.mxu0 0.0
    %496 = vmatpush.msra.mxu0 0.0
    %497 = vmatpush.msra.mxu0 0.0
    %498 = vmatpush.msra.mxu0 0.0
    %499 = vmatpush.msra.mxu0 0.0
    %500 = vmatpush.msra.mxu0 0.0
    %501 = vmatpush.msra.mxu0 0.0
    %502 = vmatpush.msra.mxu0 0.0
    %503 = vmatpush.msra.mxu0 0.0
    %504 = vmatpush.msra.mxu0 0.0
    %505 = vmatpush.msra.mxu0 0.0
    %506 = vmatpush.msra.mxu0 0.0
    %507 = vmatpush.msra.mxu0 0.0
    %508 = vmatpush.msra.mxu0 %v286
    %509 = vmatmul.f32.gmra.mxu0 %v491
    %v510 = vpop.f32.mrf.mxu0
    %v511 = vadd.f32 %v485, %v510
    %512 = vdwg.mxu0
    %513 = vrot.lane.b32.xlu0 %v103, 112
    %v514 = vpop.permute.xlu0 %513
    %515 = vrot.lane.b32.xlu0 %v103, 80
    %v516 = vpop.permute.xlu0 %515
    %v517 = vsel %vm111, %v514, 0
    %v519 = vsel %vm111, %v516, 0
    %521 = vmatpush.xpose.msra.mxu0 0.0
    %522 = vmatpush.xpose.msra.mxu0 0.0
    %523 = vmatpush.xpose.msra.mxu0 0.0
    %524 = vmatpush.xpose.msra.mxu0 0.0
    %525 = vmatpush.xpose.msra.mxu0 0.0
    %526 = vmatpush.xpose.msra.mxu0 0.0
    %527 = vmatpush.xpose.msra.mxu0 0.0
    %528 = vmatpush.xpose.msra.mxu0 0.0
    %529 = vmatpush.xpose.msra.mxu0 0.0
    %530 = vmatpush.xpose.msra.mxu0 0.0
    %531 = vmatpush.xpose.msra.mxu0 0.0
    %532 = vmatpush.xpose.msra.mxu0 0.0
    %533 = vmatpush.xpose.msra.mxu0 0.0
    %534 = vmatpush.xpose.msra.mxu0 0.0
    %535 = vmatpush.xpose.msra.mxu0 0.0
    %536 = vmatpush.xpose.msra.mxu0 %v519
    %537 = vmatmul.f32.gmra.mxu0 %v517
    %v538 = vpop.f32.mrf.mxu0
    %v539 = vadd.f32 0.0, %v538
    %540 = vdwg.mxu0
    %541 = vrot.lane.b32.xlu0 %v106, 112
    %v542 = vpop.permute.xlu0 %541
    %543 = vrot.lane.b32.xlu0 %v106, 80
    %v544 = vpop.permute.xlu0 %543
    %v545 = vsel %vm111, %v542, 0
    %v547 = vsel %vm111, %v544, 0
    %549 = vmatpush.xpose.msra.mxu0 0.0
    %550 = vmatpush.xpose.msra.mxu0 0.0
    %551 = vmatpush.xpose.msra.mxu0 0.0
    %552 = vmatpush.xpose.msra.mxu0 0.0
    %553 = vmatpush.xpose.msra.mxu0 0.0
    %554 = vmatpush.xpose.msra.mxu0 0.0
    %555 = vmatpush.xpose.msra.mxu0 0.0
    %556 = vmatpush.xpose.msra.mxu0 0.0
    %557 = vmatpush.xpose.msra.mxu0 0.0
    %558 = vmatpush.xpose.msra.mxu0 0.0
    %559 = vmatpush.xpose.msra.mxu0 0.0
    %560 = vmatpush.xpose.msra.mxu0 0.0
    %561 = vmatpush.xpose.msra.mxu0 0.0
    %562 = vmatpush.xpose.msra.mxu0 0.0
    %563 = vmatpush.xpose.msra.mxu0 0.0
    %564 = vmatpush.xpose.msra.mxu0 %v547
    %565 = vmatmul.f32.gmra.mxu0 %v545
    %v566 = vpop.f32.mrf.mxu0
    %v567 = vadd.f32 0.0, %v566
    %568 = vdwg.mxu0
    %v569 = vsel %vm111, %v539, -inf
    %570 = vmax.xlane.f32.xlu0 %v569
    %v571 = vpop.xlane.xlu0 %570
    %v572 = vsel %vm111, %v567, -inf
    %573 = vmax.xlane.f32.xlu0 %v572
    %v574 = vpop.xlane.xlu0 %573
    %v575 = vsub.f32 %v539, %v571
    %v576 = vsub.f32 %v567, %v574
    %v577 = vmul.f32 %v575, 1.442695
    %v578 = vpow.pop %v577
    %v579 = vmul.f32 %v576, 1.442695
    %v580 = vpow.pop %v579
    %v581 = vsel %vm111, %v578, 0.0
    %582 = vadd.xlane.f32.xlu0 %v581
    %v583 = vpop.xlane.xlu0 %582
    %v584 = vsel %vm111, %v580, 0.0
    %585 = vadd.xlane.f32.xlu0 %v584
    %v586 = vpop.xlane.xlu0 %585
    %v587 = vrcp.pop %v583
    %v588 = vmul.f32 %v583, %v587
    %v589 = vsub.f32 1.0, %v588
    %v590 = vmul.f32 %v587, %v589
    %v591 = vadd.f32 %v587, %v590
    %vm592 = vweird.f32 %v583
    %vm593 = vweird.f32 %v587
    %vm594 = vmor %vm592, %vm593
    %v595 = vsel %vm594, %v587, %v591
    %v596 = vand.u32 2147483647, %v583
    %vm597 = vcmp.eq.f32.partialorder %v596, 8.507059e+37
    %v598 = vand.u32 %v583, 2147483648
    %v599 = vor.u32 1.1754944e-38, %v598
    %v600 = vsel %vm597, %v599, %v595
    %v601 = vmul.f32 %v578, %v600
    %v602 = vrcp.pop %v586
    %v603 = vmul.f32 %v586, %v602
    %v604 = vsub.f32 1.0, %v603
    %v605 = vmul.f32 %v602, %v604
    %v606 = vadd.f32 %v602, %v605
    %vm607 = vweird.f32 %v586
    %vm608 = vweird.f32 %v602
    %vm609 = vmor %vm607, %vm608
    %v610 = vsel %vm609, %v602, %v606
    %v611 = vand.u32 2147483647, %v586
    %vm612 = vcmp.eq.f32.partialorder %v611, 8.507059e+37
    %v613 = vand.u32 %v586, 2147483648
    %v614 = vor.u32 1.1754944e-38, %v613
    %v615 = vsel %vm612, %v614, %v610
    %v616 = vmul.f32 %v580, %v615
    %v617 = vsel %vm111, %v601, 0.0
    %v618 = vrot.slane %v617, 4
    %v619 = vadd.f32 %v617, %v618
    %v620 = vrot.slane %v619, 2
    %v621 = vadd.f32 %v619, %v620
    %v622 = vrot.slane %v621, 1
    %v623 = vadd.f32 %v621, %v622
    %v624 = vsel %vm111, %v616, 0.0
    %v625 = vrot.slane %v624, 4
    %v626 = vadd.f32 %v624, %v625
    %v627 = vrot.slane %v626, 2
    %v628 = vadd.f32 %v626, %v627
    %v629 = vrot.slane %v628, 1
    %v630 = vadd.f32 %v628, %v629
    %v631 = vmul.f32 %v623, %v231
    %v632 = vmul.f32 %v630, %v231
    %633 = vrot.lane.b32.xlu0 %v103, 48
    %v634 = vpop.permute.xlu0 %633
    %v637 = vsel %vm111, %v631, 0
    %639 = vmatpush.msra.mxu0 0.0
    %640 = vmatpush.msra.mxu0 0.0
    %641 = vmatpush.msra.mxu0 0.0
    %642 = vmatpush.msra.mxu0 0.0
    %643 = vmatpush.msra.mxu0 0.0
    %644 = vmatpush.msra.mxu0 0.0
    %645 = vmatpush.msra.mxu0 0.0
    %646 = vmatpush.msra.mxu0 0.0
    %647 = vmatpush.msra.mxu0 0.0
    %648 = vmatpush.msra.mxu0 0.0
    %649 = vmatpush.msra.mxu0 0.0
    %650 = vmatpush.msra.mxu0 0.0
    %651 = vmatpush.msra.mxu0 0.0
    %652 = vmatpush.msra.mxu0 0.0
    %653 = vmatpush.msra.mxu0 0.0
    %654 = vmatpush.msra.mxu0 %v634
    %655 = vmatmul.f32.gmra.mxu0 %v637
    %v656 = vpop.f32.mrf.mxu0
    %v657 = vadd.f32 0.0, %v656
    %658 = vdwg.mxu0
    %659 = vrot.lane.b32.xlu0 %v106, 48
    %v660 = vpop.permute.xlu0 %659
    %v663 = vsel %vm111, %v632, 0
    %665 = vmatpush.msra.mxu0 0.0
    %666 = vmatpush.msra.mxu0 0.0
    %667 = vmatpush.msra.mxu0 0.0
    %668 = vmatpush.msra.mxu0 0.0
    %669 = vmatpush.msra.mxu0 0.0
    %670 = vmatpush.msra.mxu0 0.0
    %671 = vmatpush.msra.mxu0 0.0
    %672 = vmatpush.msra.mxu0 0.0
    %673 = vmatpush.msra.mxu0 0.0
    %674 = vmatpush.msra.mxu0 0.0
    %675 = vmatpush.msra.mxu0 0.0
    %676 = vmatpush.msra.mxu0 0.0
    %677 = vmatpush.msra.mxu0 0.0
    %678 = vmatpush.msra.mxu0 0.0
    %679 = vmatpush.msra.mxu0 0.0
    %680 = vmatpush.msra.mxu0 %v660
    %681 = vmatmul.f32.gmra.mxu0 %v663
    %v682 = vpop.f32.mrf.mxu0
    %v683 = vadd.f32 0.0, %v682
    %684 = vdwg.mxu0
    %v685 = vld [vmem:[#allocation7 + $0x10] sm:$0xff]
    %v688 = vrot.slane %v683, 7
    %v689 = vsel %vm463, %v688, %v657
    %v690 = vsel %vm111, %v689, 0
    %692 = vmatpush.msra.mxu0 0.0
    %693 = vmatpush.msra.mxu0 0.0
    %694 = vmatpush.msra.mxu0 0.0
    %695 = vmatpush.msra.mxu0 0.0
    %696 = vmatpush.msra.mxu0 0.0
    %697 = vmatpush.msra.mxu0 0.0
    %698 = vmatpush.msra.mxu0 0.0
    %699 = vmatpush.msra.mxu0 0.0
    %700 = vmatpush.msra.mxu0 0.0
    %701 = vmatpush.msra.mxu0 0.0
    %702 = vmatpush.msra.mxu0 0.0
    %703 = vmatpush.msra.mxu0 0.0
    %704 = vmatpush.msra.mxu0 0.0
    %705 = vmatpush.msra.mxu0 0.0
    %706 = vmatpush.msra.mxu0 0.0
    %707 = vmatpush.msra.mxu0 %v685
    %708 = vmatmul.f32.gmra.mxu0 %v690
    %v709 = vpop.f32.mrf.mxu0
    %v710 = vadd.f32 0.0, %v709
    %711 = vdwg.mxu0
    %v712 = vadd.f32 %v511, %v710
    %713 = vrot.lane.b32.xlu0 %v103, 104
    %v714 = vpop.permute.xlu0 %713
    %715 = vrot.lane.b32.xlu0 %v103, 72
    %v716 = vpop.permute.xlu0 %715
    %v717 = vsel %vm111, %v714, 0
    %v719 = vsel %vm111, %v716, 0
    %721 = vmatpush.xpose.msra.mxu0 0.0
    %722 = vmatpush.xpose.msra.mxu0 0.0
    %723 = vmatpush.xpose.msra.mxu0 0.0
    %724 = vmatpush.xpose.msra.mxu0 0.0
    %725 = vmatpush.xpose.msra.mxu0 0.0
    %726 = vmatpush.xpose.msra.mxu0 0.0
    %727 = vmatpush.xpose.msra.mxu0 0.0
    %728 = vmatpush.xpose.msra.mxu0 0.0
    %729 = vmatpush.xpose.msra.mxu0 0.0
    %730 = vmatpush.xpose.msra.mxu0 0.0
    %731 = vmatpush.xpose.msra.mxu0 0.0
    %732 = vmatpush.xpose.msra.mxu0 0.0
    %733 = vmatpush.xpose.msra.mxu0 0.0
    %734 = vmatpush.xpose.msra.mxu0 0.0
    %735 = vmatpush.xpose.msra.mxu0 0.0
    %736 = vmatpush.xpose.msra.mxu0 %v719
    %737 = vmatmul.f32.gmra.mxu0 %v717
    %v738 = vpop.f32.mrf.mxu0
    %v739 = vadd.f32 0.0, %v738
    %740 = vdwg.mxu0
    %741 = vrot.lane.b32.xlu0 %v106, 104
    %v742 = vpop.permute.xlu0 %741
    %743 = vrot.lane.b32.xlu0 %v106, 72
    %v744 = vpop.permute.xlu0 %743
    %v745 = vsel %vm111, %v742, 0
    %v747 = vsel %vm111, %v744, 0
    %749 = vmatpush.xpose.msra.mxu0 0.0
    %750 = vmatpush.xpose.msra.mxu0 0.0
    %751 = vmatpush.xpose.msra.mxu0 0.0
    %752 = vmatpush.xpose.msra.mxu0 0.0
    %753 = vmatpush.xpose.msra.mxu0 0.0
    %754 = vmatpush.xpose.msra.mxu0 0.0
    %755 = vmatpush.xpose.msra.mxu0 0.0
    %756 = vmatpush.xpose.msra.mxu0 0.0
    %757 = vmatpush.xpose.msra.mxu0 0.0
    %758 = vmatpush.xpose.msra.mxu0 0.0
    %759 = vmatpush.xpose.msra.mxu0 0.0
    %760 = vmatpush.xpose.msra.mxu0 0.0
    %761 = vmatpush.xpose.msra.mxu0 0.0
    %762 = vmatpush.xpose.msra.mxu0 0.0
    %763 = vmatpush.xpose.msra.mxu0 0.0
    %764 = vmatpush.xpose.msra.mxu0 %v747
    %765 = vmatmul.f32.gmra.mxu0 %v745
    %v766 = vpop.f32.mrf.mxu0
    %v767 = vadd.f32 0.0, %v766
    %768 = vdwg.mxu0
    %v769 = vsel %vm111, %v739, -inf
    %770 = vmax.xlane.f32.xlu0 %v769
    %v771 = vpop.xlane.xlu0 %770
    %v772 = vsel %vm111, %v767, -inf
    %773 = vmax.xlane.f32.xlu0 %v772
    %v774 = vpop.xlane.xlu0 %773
    %v775 = vsub.f32 %v739, %v771
    %v776 = vsub.f32 %v767, %v774
    %v777 = vmul.f32 %v775, 1.442695
    %v778 = vpow.pop %v777
    %v779 = vmul.f32 %v776, 1.442695
    %v780 = vpow.pop %v779
    %v781 = vsel %vm111, %v778, 0.0
    %782 = vadd.xlane.f32.xlu0 %v781
    %v783 = vpop.xlane.xlu0 %782
    %v784 = vsel %vm111, %v780, 0.0
    %785 = vadd.xlane.f32.xlu0 %v784
    %v786 = vpop.xlane.xlu0 %785
    %v787 = vrcp.pop %v783
    %v788 = vmul.f32 %v783, %v787
    %v789 = vsub.f32 1.0, %v788
    %v790 = vmul.f32 %v787, %v789
    %v791 = vadd.f32 %v787, %v790
    %vm792 = vweird.f32 %v783
    %vm793 = vweird.f32 %v787
    %vm794 = vmor %vm792, %vm793
    %v795 = vsel %vm794, %v787, %v791
    %v796 = vand.u32 2147483647, %v783
    %vm797 = vcmp.eq.f32.partialorder %v796, 8.507059e+37
    %v798 = vand.u32 %v783, 2147483648
    %v799 = vor.u32 1.1754944e-38, %v798
    %v800 = vsel %vm797, %v799, %v795
    %v801 = vmul.f32 %v778, %v800
    %v802 = vrcp.pop %v786
    %v803 = vmul.f32 %v786, %v802
    %v804 = vsub.f32 1.0, %v803
    %v805 = vmul.f32 %v802, %v804
    %v806 = vadd.f32 %v802, %v805
    %vm807 = vweird.f32 %v786
    %vm808 = vweird.f32 %v802
    %vm809 = vmor %vm807, %vm808
    %v810 = vsel %vm809, %v802, %v806
    %v811 = vand.u32 2147483647, %v786
    %vm812 = vcmp.eq.f32.partialorder %v811, 8.507059e+37
    %v813 = vand.u32 %v786, 2147483648
    %v814 = vor.u32 1.1754944e-38, %v813
    %v815 = vsel %vm812, %v814, %v810
    %v816 = vmul.f32 %v780, %v815
    %v817 = vsel %vm111, %v801, 0.0
    %v818 = vrot.slane %v817, 4
    %v819 = vadd.f32 %v817, %v818
    %v820 = vrot.slane %v819, 2
    %v821 = vadd.f32 %v819, %v820
    %v822 = vrot.slane %v821, 1
    %v823 = vadd.f32 %v821, %v822
    %v824 = vsel %vm111, %v816, 0.0
    %v825 = vrot.slane %v824, 4
    %v826 = vadd.f32 %v824, %v825
    %v827 = vrot.slane %v826, 2
    %v828 = vadd.f32 %v826, %v827
    %v829 = vrot.slane %v828, 1
    %v830 = vadd.f32 %v828, %v829
    %v831 = vmul.f32 %v823, %v231
    %v832 = vmul.f32 %v830, %v231
    %833 = vrot.lane.b32.xlu0 %v103, 40
    %v834 = vpop.permute.xlu0 %833
    %v837 = vsel %vm111, %v831, 0
    %839 = vmatpush.msra.mxu0 0.0
    %840 = vmatpush.msra.mxu0 0.0
    %841 = vmatpush.msra.mxu0 0.0
    %842 = vmatpush.msra.mxu0 0.0
    %843 = vmatpush.msra.mxu0 0.0
    %844 = vmatpush.msra.mxu0 0.0
    %845 = vmatpush.msra.mxu0 0.0
    %846 = vmatpush.msra.mxu0 0.0
    %847 = vmatpush.msra.mxu0 0.0
    %848 = vmatpush.msra.mxu0 0.0
    %849 = vmatpush.msra.mxu0 0.0
    %850 = vmatpush.msra.mxu0 0.0
    %851 = vmatpush.msra.mxu0 0.0
    %852 = vmatpush.msra.mxu0 0.0
    %853 = vmatpush.msra.mxu0 0.0
    %854 = vmatpush.msra.mxu0 %v834
    %855 = vmatmul.f32.gmra.mxu0 %v837
    %v856 = vpop.f32.mrf.mxu0
    %v857 = vadd.f32 0.0, %v856
    %858 = vdwg.mxu0
    %859 = vrot.lane.b32.xlu0 %v106, 40
    %v860 = vpop.permute.xlu0 %859
    %v863 = vsel %vm111, %v832, 0
    %865 = vmatpush.msra.mxu0 0.0
    %866 = vmatpush.msra.mxu0 0.0
    %867 = vmatpush.msra.mxu0 0.0
    %868 = vmatpush.msra.mxu0 0.0
    %869 = vmatpush.msra.mxu0 0.0
    %870 = vmatpush.msra.mxu0 0.0
    %871 = vmatpush.msra.mxu0 0.0
    %872 = vmatpush.msra.mxu0 0.0
    %873 = vmatpush.msra.mxu0 0.0
    %874 = vmatpush.msra.mxu0 0.0
    %875 = vmatpush.msra.mxu0 0.0
    %876 = vmatpush.msra.mxu0 0.0
    %877 = vmatpush.msra.mxu0 0.0
    %878 = vmatpush.msra.mxu0 0.0
    %879 = vmatpush.msra.mxu0 0.0
    %880 = vmatpush.msra.mxu0 %v860
    %881 = vmatmul.f32.gmra.mxu0 %v863
    %v882 = vpop.f32.mrf.mxu0
    %v883 = vadd.f32 0.0, %v882
    %884 = vdwg.mxu0
    %v885 = vld [vmem:[#allocation7 + $0x18] sm:$0xff]
    %v888 = vrot.slane %v883, 7
    %v889 = vsel %vm463, %v888, %v857
    %v890 = vsel %vm111, %v889, 0
    %892 = vmatpush.msra.mxu0 0.0
    %893 = vmatpush.msra.mxu0 0.0
    %894 = vmatpush.msra.mxu0 0.0
    %895 = vmatpush.msra.mxu0 0.0
    %896 = vmatpush.msra.mxu0 0.0
    %897 = vmatpush.msra.mxu0 0.0
    %898 = vmatpush.msra.mxu0 0.0
    %899 = vmatpush.msra.mxu0 0.0
    %900 = vmatpush.msra.mxu0 0.0
    %901 = vmatpush.msra.mxu0 0.0
    %902 = vmatpush.msra.mxu0 0.0
    %903 = vmatpush.msra.mxu0 0.0
    %904 = vmatpush.msra.mxu0 0.0
    %905 = vmatpush.msra.mxu0 0.0
    %906 = vmatpush.msra.mxu0 0.0
    %907 = vmatpush.msra.mxu0 %v885
    %908 = vmatmul.f32.gmra.mxu0 %v890
    %v909 = vpop.f32.mrf.mxu0
    %v910 = vadd.f32 0.0, %v909
    %911 = vdwg.mxu0
    %v912 = vadd.f32 %v712, %v910
    %v913 = vld [vmem:[%s4] sm:$0x1]
    %v915 = vperm.slane %v913, 0
    %v917 = vadd.f32 %v912, %v915
    %vm918 = vcmask 254976
    %919 = vst.msk [vmem:[#allocation8] sm:$0x3] %vm918, %v917
    // Predicated region
    $region34: #{tpu_custom_call.1} parent=1 // pred_check
      _
    $region35: #{tpu_custom_call.1} parent=1 // pred_check_branch
      %921 = sbr.rel (0) target = $region37
    $region36: #{tpu_custom_call.1} parent=1 // pred_region
      %923 = vsyncadd [#allocation4], 0
      %s925 = sshll.u32 [#allocation8], 4
      %s926 = int_to_ptr.vmem [resolvable:$true] %s925
      %s927 = sshll.u32 %s5, 4
      %s928 = int_to_ptr.hbm [resolvable:$true] %s927
      %930 = dma.vmem_to_hbm [thread:$0]  %s926, 32, %s928, [#allocation4]
    $region37: #{tpu_custom_call.1} parent=1 // pred_fallthru
      _
    // Predicated region
    $region38: #{tpu_custom_call.1} parent=1 // pred_check
      _
    $region39: #{tpu_custom_call.1} parent=1 // pred_check_branch
      %932 = sbr.rel (0) target = $region41
    $region40: #{tpu_custom_call.1} parent=1 // pred_region
      %934 = dma.done [#allocation4], 32
    $region41: #{tpu_custom_call.1} parent=1 // pred_fallthru
      _
    %935 = vsyncpa [#allocation3], 1
    %936 = vsyncpa [#allocation6], 1
    %937 = vsyncpa [#allocation4], 1

</llo_original>
